<compile_context>
chip_gen: v6e
topology: v6e:2x2x1
jax: 0.10.0
libtpu: 0.0.40
codegen_flags: <defaults>
</compile_context>

<pallas_src>
import functools
import math

import jax
import jax.numpy as jnp
from jax.experimental import pallas as pl
from jax.experimental.pallas import tpu as pltpu


# ---------------------------------------------------------------------------
# Shared math: one TransformerConv layer on padded, packed operands.
# Used both INSIDE the Pallas kernel (on loaded refs) and as the plain-JAX
# mirrored reference, so the correctness check is tight.
# ---------------------------------------------------------------------------
def _transformer_conv_block(x, mask, w_packed, b_packed, c_pad, scale, apply_relu):
    """x: [Np, Cin_pad] f32, mask: [Np, Np] f32 (mask[i,j]=1 iff edge j->i),
    w_packed: [Cin_pad, 4*c_pad] bf16 = [Wq | Wk | Wv | Wskip],
    b_packed: [1, 4*c_pad] f32.  Returns [Np, c_pad] f32."""
    # Fused QKV+skip projection: one wide MXU matmul (bf16 in, f32 accumulate).
    proj = jnp.dot(x.astype(jnp.bfloat16), w_packed,
                   preferred_element_type=jnp.float32) + b_packed
    q = proj[:, 0 * c_pad:1 * c_pad]
    k = proj[:, 1 * c_pad:2 * c_pad]
    v = proj[:, 2 * c_pad:3 * c_pad]
    skip = proj[:, 3 * c_pad:4 * c_pad]

    # Attention scores s[i, j] = (q_i . k_j) * scale, restricted to neighbours.
    s = jax.lax.dot_general(
        q.astype(jnp.bfloat16), k.astype(jnp.bfloat16),
        (((1,), (1,)), ((), ())),
        preferred_element_type=jnp.float32) * scale
    s = jnp.where(mask > 0.0, s, jnp.float32(-1e30))

    # Masked, numerically-stable softmax over in-neighbours (safe for rows with
    # no neighbours: numerator is forced to 0 by the mask, denom guarded).
    m = jnp.max(s, axis=-1, keepdims=True)
    p = jnp.exp(s - m) * mask
    denom = jnp.maximum(jnp.sum(p, axis=-1, keepdims=True), jnp.float32(1e-30))
    alpha = p / denom

    agg = jnp.dot(alpha.astype(jnp.bfloat16), v.astype(jnp.bfloat16),
                  preferred_element_type=jnp.float32)
    out = agg + skip
    if apply_relu:
        out = jnp.maximum(out, 0.0)
    return out


# ---------------------------------------------------------------------------
# Fused two-layer kernel: conv1 -> relu -> (dropout=identity) -> conv2
# ---------------------------------------------------------------------------
def _fused_transformer_kernel(mask_ref, x_ref, w1_ref, b1_ref, w2_ref, b2_ref,
                              o_ref, *, h_pad, o_pad, scale1, scale2):
    mask = mask_ref[...]
    x = x_ref[...]
    h = _transformer_conv_block(x, mask, w1_ref[...], b1_ref[...],
                                h_pad, scale1, apply_relu=True)
    # F.dropout(p=0.5) between the layers: identity in eval mode.
    out = _transformer_conv_block(h, mask, w2_ref[...], b2_ref[...],
                                  o_pad, scale2, apply_relu=False)
    o_ref[...] = out.astype(o_ref.dtype)


# ---------------------------------------------------------------------------
# Plain-JAX glue: padding / packing / mask construction
# ---------------------------------------------------------------------------
def _round_up(v, m):
    return (v + m - 1) // m * m


def _pack_layer(p, c_in_pad, c_out_pad):
    """Zero-pad and pack {Wq,Wk,Wv,Wskip} -> [c_in_pad, 4*c_out_pad] bf16 and the
    four biases -> [1, 4*c_out_pad] f32.  Zero padding keeps the math exact."""
    c_in, c_out = p["wq"].shape

    def padw(w):
        return jnp.zeros((c_in_pad, c_out_pad), jnp.float32).at[:c_in, :c_out].set(w)

    def padb(b):
        return jnp.zeros((c_out_pad,), jnp.float32).at[:c_out].set(b)

    w = jnp.concatenate([padw(p["wq"]), padw(p["wk"]),
                         padw(p["wv"]), padw(p["ws"])], axis=1)
    b = jnp.concatenate([padb(p["bq"]), padb(p["bk"]),
                         padb(p["bv"]), padb(p["bs"])])[None, :]
    return w.astype(jnp.bfloat16), b.astype(jnp.float32)


def _dense_neighbor_mask(edge_index, n_pad):
    """mask[i, j] = 1.0 iff there is an edge j -> i (source j, target i).
    TransformerConv does NOT add self-loops.  (Duplicate edges collapse.)"""
    src, dst = edge_index[0], edge_index[1]
    mask = jnp.zeros((n_pad, n_pad), jnp.float32)
    return mask.at[dst, src].set(1.0)


def _prepare_padded_inputs(params, x, edge_index):
    n, c_in = x.shape
    hidden = params["conv1"]["wq"].shape[1]
    out_c = params["conv2"]["wq"].shape[1]

    n_pad = _round_up(n, 8)            # sublane-aligned rows
    cin_pad = _round_up(c_in, 128)     # lane-dense channel dims
    h_pad = _round_up(hidden, 128)
    o_pad = _round_up(out_c, 128)

    mask = _dense_neighbor_mask(edge_index, n_pad)
    x_pad = jnp.zeros((n_pad, cin_pad), jnp.float32).at[:n, :c_in].set(x)

    w1, b1 = _pack_layer(params["conv1"], cin_pad, h_pad)
    w2, b2 = _pack_layer(params["conv2"], h_pad, o_pad)

    dims = dict(n=n, out_c=out_c, n_pad=n_pad, cin_pad=cin_pad,
                h_pad=h_pad, o_pad=o_pad,
                scale1=1.0 / math.sqrt(hidden),   # PyG scales by sqrt(out_channels)
                scale2=1.0 / math.sqrt(out_c))
    return mask, x_pad, w1, b1, w2, b2, dims


# ---------------------------------------------------------------------------
# Forward pass: single fused pallas_call (no grid, full arrays in VMEM)
# ---------------------------------------------------------------------------
def transformer_forward(params, x, edge_index):
    mask, x_pad, w1, b1, w2, b2, d = _prepare_padded_inputs(params, x, edge_index)

    kernel = functools.partial(_fused_transformer_kernel,
                               h_pad=d["h_pad"], o_pad=d["o_pad"],
                               scale1=d["scale1"], scale2=d["scale2"])

    np_, hp, op, cp = d["n_pad"], d["h_pad"], d["o_pad"], d["cin_pad"]
    flops = 2 * np_ * (cp * 4 * hp + np_ * hp + np_ * hp       # layer 1
                       + hp * 4 * op + np_ * op + np_ * op)    # layer 2
    bytes_accessed = (mask.size * 4 + x_pad.size * 4
                      + w1.size * 2 + w2.size * 2
                      + b1.size * 4 + b2.size * 4 + np_ * op * 4)

    out = pl.pallas_call(
        kernel,
        out_shape=jax.ShapeDtypeStruct((np_, op), jnp.float32),
        in_specs=[pl.BlockSpec(memory_space=pltpu.MemorySpace.VMEM)
                  for _ in range(6)],
        out_specs=pl.BlockSpec(memory_space=pltpu.MemorySpace.VMEM),
        cost_estimate=pl.CostEstimate(flops=flops,
                                      transcendentals=2 * np_ * np_,
                                      bytes_accessed=bytes_accessed),
    )(mask, x_pad, w1, b1, w2, b2)
    return out[:d["n"], :d["out_c"]]


def transformer_forward_reference(params, x, edge_index):
    """Plain-JAX mirror of the kernel math (same packing, same bf16 matmuls)."""
    mask, x_pad, w1, b1, w2, b2, d = _prepare_padded_inputs(params, x, edge_index)
    h = _transformer_conv_block(x_pad, mask, w1, b1, d["h_pad"], d["scale1"], True)
    out = _transformer_conv_block(h, mask, w2, b2, d["o_pad"], d["scale2"], False)
    return out[:d["n"], :d["out_c"]]


# ---------------------------------------------------------------------------
# Independent full-f32, unpadded reference of the TransformerConv math
# (catches packing / padding mistakes; compared with a loose tolerance because
# the kernel intentionally uses bf16 matmul operands).
# ---------------------------------------------------------------------------
def _transformer_conv_f32(x, mask, p, scale, apply_relu):
    q = x @ p["wq"] + p["bq"]
    k = x @ p["wk"] + p["bk"]
    v = x @ p["wv"] + p["bv"]
    skip = x @ p["ws"] + p["bs"]
    s = jnp.where(mask > 0.0, (q @ k.T) * scale, -1e30)
    e = jnp.exp(s - s.max(-1, keepdims=True)) * mask
    alpha = e / jnp.maximum(e.sum(-1, keepdims=True), 1e-30)
    out = alpha @ v + skip
    return jnp.maximum(out, 0.0) if apply_relu else out


# ---------------------------------------------------------------------------
# Parameter init (deterministic glorot stand-in for torch.manual_seed(12345))
# ---------------------------------------------------------------------------
def init_params(key, in_channels, hidden_channels, out_channels):
    keys = jax.random.split(key, 8)

    def glorot(k, fi, fo):
        lim = jnp.sqrt(6.0 / (fi + fo))
        return jax.random.uniform(k, (fi, fo), jnp.float32, -lim, lim)

    def layer(ks, fi, fo):
        kq, kk, kv, ksk = ks
        z = lambda: jnp.zeros((fo,), jnp.float32)
        return {"wq": glorot(kq, fi, fo), "bq": z(),
                "wk": glorot(kk, fi, fo), "bk": z(),
                "wv": glorot(kv, fi, fo), "bv": z(),
                "ws": glorot(ksk, fi, fo), "bs": z()}

    return {"conv1": layer(keys[:4], in_channels, hidden_channels),
            "conv2": layer(keys[4:], hidden_channels, out_channels)}


if __name__ == "__main__":
    key = jax.random.PRNGKey(0)
    kx, kp = jax.random.split(key)

    num_nodes = 16
    in_channels = 8
    hidden_channels = 32
    out_channels = 4

    # Node features [N, C_in]
    x = jax.random.normal(kx, (num_nodes, in_channels), dtype=jnp.float32)

    # Deterministic undirected ring graph: edges i <-> (i+1) % N, shape [2, 2N]
    idx = jnp.arange(num_nodes)
    nxt = (idx + 1) % num_nodes
    edge_index = jnp.stack(
        [jnp.concatenate([idx, nxt]), jnp.concatenate([nxt, idx])], axis=0
    ).astype(jnp.int32)

    params = init_params(kp, in_channels, hidden_channels, out_channels)

    out = transformer_forward(params, x, edge_index)
    out = jax.block_until_ready(out)
    assert out.shape == (num_nodes, out_channels)

    # Tight check: plain-JAX mirror of the exact kernel math (same bf16 casts).
    ref_mirror = transformer_forward_reference(params, x, edge_index)
    assert jnp.allclose(out, ref_mirror, atol=2e-3, rtol=2e-3), (
        jnp.max(jnp.abs(out - ref_mirror)))

    # Loose independent check: full-f32, unpadded TransformerConv math.
    mask_f32 = _dense_neighbor_mask(edge_index, num_nodes)
    h_ref = _transformer_conv_f32(x, mask_f32, params["conv1"],
                                  1.0 / math.sqrt(hidden_channels), True)
    ref_f32 = _transformer_conv_f32(h_ref, mask_f32, params["conv2"],
                                    1.0 / math.sqrt(out_channels), False)
    assert jnp.allclose(out, ref_f32, atol=1e-1, rtol=1e-1), (
        jnp.max(jnp.abs(out - ref_f32)))

    print("KERNEL_OK")
</pallas_src>

<mosaic_0001>
module attributes {stable_mosaic.version = 11 : i64} {
  func.func @_fused_transformer_kernel(%arg0: memref<16x16xf32, #tpu.memory_space<vmem>>, %arg1: memref<16x128xf32, #tpu.memory_space<vmem>>, %arg2: memref<128x512xbf16, #tpu.memory_space<vmem>>, %arg3: memref<1x512xf32, #tpu.memory_space<vmem>>, %arg4: memref<128x512xbf16, #tpu.memory_space<vmem>>, %arg5: memref<1x512xf32, #tpu.memory_space<vmem>>, %arg6: memref<16x128xf32, #tpu.memory_space<vmem>>) attributes {dimension_semantics = [], scalar_prefetch = 0 : i64, scratch_operands = 0 : i64, tpu.core_type = #tpu.core_type<tc>} {
    %c0 = arith.constant 0 : index
    %c0_0 = arith.constant 0 : index
    %0 = vector.load %arg0[%c0, %c0_0] : memref<16x16xf32, #tpu.memory_space<vmem>>, vector<16x16xf32>
    %c0_1 = arith.constant 0 : index
    %c0_2 = arith.constant 0 : index
    %1 = vector.load %arg1[%c0_1, %c0_2] : memref<16x128xf32, #tpu.memory_space<vmem>>, vector<16x128xf32>
    %c0_3 = arith.constant 0 : index
    %c0_4 = arith.constant 0 : index
    %2 = vector.load %arg2[%c0_3, %c0_4] : memref<128x512xbf16, #tpu.memory_space<vmem>>, vector<128x512xbf16>
    %c0_5 = arith.constant 0 : index
    %c0_6 = arith.constant 0 : index
    %3 = vector.load %arg3[%c0_5, %c0_6] : memref<1x512xf32, #tpu.memory_space<vmem>>, vector<1x512xf32>
    %4 = arith.truncf %1 : vector<16x128xf32> to vector<16x128xbf16>
    %cst = arith.constant dense<0.000000e+00> : vector<16x512xf32>
    %5 = tpu.matmul %4, %2, %cst {dimension_numbers = #tpu.dot_dimension_numbers<[1], [0], [0], [1], [0, 0, 1, 1], [], []>} : vector<16x128xbf16>, vector<128x512xbf16>, vector<16x512xf32> -> vector<16x512xf32>
    %6 = vector.broadcast %3 : vector<1x512xf32> to vector<16x512xf32>
    %7 = arith.addf %5, %6 : vector<16x512xf32>
    %8 = vector.extract_strided_slice %7 {offsets = [0, 0], sizes = [16, 128], strides = [1, 1]} : vector<16x512xf32> to vector<16x128xf32>
    %9 = vector.extract_strided_slice %7 {offsets = [0, 128], sizes = [16, 128], strides = [1, 1]} : vector<16x512xf32> to vector<16x128xf32>
    %10 = vector.extract_strided_slice %7 {offsets = [0, 256], sizes = [16, 128], strides = [1, 1]} : vector<16x512xf32> to vector<16x128xf32>
    %11 = vector.extract_strided_slice %7 {offsets = [0, 384], sizes = [16, 128], strides = [1, 1]} : vector<16x512xf32> to vector<16x128xf32>
    %12 = arith.truncf %8 : vector<16x128xf32> to vector<16x128xbf16>
    %13 = arith.truncf %9 : vector<16x128xf32> to vector<16x128xbf16>
    %cst_7 = arith.constant dense<0.000000e+00> : vector<16x16xf32>
    %14 = tpu.matmul %12, %13, %cst_7 {dimension_numbers = #tpu.dot_dimension_numbers<[1], [1], [0], [0], [0, 0, 1, 0], [], []>} : vector<16x128xbf16>, vector<16x128xbf16>, vector<16x16xf32> -> vector<16x16xf32>
    %cst_8 = arith.constant 0.176776692 : f32
    %15 = vector.broadcast %cst_8 : f32 to vector<16x16xf32>
    %16 = arith.mulf %14, %15 : vector<16x16xf32>
    %cst_9 = arith.constant 0.000000e+00 : f32
    %17 = vector.broadcast %cst_9 : f32 to vector<16x16xf32>
    %18 = arith.cmpf ogt, %0, %17 : vector<16x16xf32>
    %cst_10 = arith.constant -1.000000e+30 : f32
    %19 = vector.broadcast %cst_10 : f32 to vector<16x16xf32>
    %20 = arith.select %18, %16, %19 : vector<16x16xi1>, vector<16x16xf32>
    %cst_11 = arith.constant dense<0xFF800000> : vector<16xf32>
    %21 = vector.multi_reduction <maximumf>, %20, %cst_11 [1] : vector<16x16xf32> to vector<16xf32>
    %22 = vector.shape_cast %21 : vector<16xf32> to vector<16x1xf32>
    %23 = vector.broadcast %22 : vector<16x1xf32> to vector<16x16xf32>
    %24 = arith.subf %20, %23 : vector<16x16xf32>
    %25 = math.exp %24 : vector<16x16xf32>
    %26 = arith.mulf %25, %0 : vector<16x16xf32>
    %cst_12 = arith.constant dense<0.000000e+00> : vector<16xf32>
    %27 = vector.multi_reduction <add>, %26, %cst_12 [1] : vector<16x16xf32> to vector<16xf32>
    %28 = vector.shape_cast %27 : vector<16xf32> to vector<16x1xf32>
    %cst_13 = arith.constant 1.000000e-30 : f32
    %29 = vector.broadcast %cst_13 : f32 to vector<16x1xf32>
    %30 = arith.maximumf %28, %29 : vector<16x1xf32>
    %31 = vector.broadcast %30 : vector<16x1xf32> to vector<16x16xf32>
    %32 = arith.divf %26, %31 : vector<16x16xf32>
    %33 = arith.truncf %32 : vector<16x16xf32> to vector<16x16xbf16>
    %34 = arith.truncf %10 : vector<16x128xf32> to vector<16x128xbf16>
    %cst_14 = arith.constant dense<0.000000e+00> : vector<16x128xf32>
    %35 = tpu.matmul %33, %34, %cst_14 {dimension_numbers = #tpu.dot_dimension_numbers<[1], [0], [0], [1], [0, 0, 1, 1], [], []>} : vector<16x16xbf16>, vector<16x128xbf16>, vector<16x128xf32> -> vector<16x128xf32>
    %36 = arith.addf %35, %11 : vector<16x128xf32>
    %cst_15 = arith.constant 0.000000e+00 : f32
    %37 = vector.broadcast %cst_15 : f32 to vector<16x128xf32>
    %38 = arith.maximumf %36, %37 : vector<16x128xf32>
    %c0_16 = arith.constant 0 : index
    %c0_17 = arith.constant 0 : index
    %39 = vector.load %arg4[%c0_16, %c0_17] : memref<128x512xbf16, #tpu.memory_space<vmem>>, vector<128x512xbf16>
    %c0_18 = arith.constant 0 : index
    %c0_19 = arith.constant 0 : index
    %40 = vector.load %arg5[%c0_18, %c0_19] : memref<1x512xf32, #tpu.memory_space<vmem>>, vector<1x512xf32>
    %41 = arith.truncf %38 : vector<16x128xf32> to vector<16x128xbf16>
    %cst_20 = arith.constant dense<0.000000e+00> : vector<16x512xf32>
    %42 = tpu.matmul %41, %39, %cst_20 {dimension_numbers = #tpu.dot_dimension_numbers<[1], [0], [0], [1], [0, 0, 1, 1], [], []>} : vector<16x128xbf16>, vector<128x512xbf16>, vector<16x512xf32> -> vector<16x512xf32>
    %43 = vector.broadcast %40 : vector<1x512xf32> to vector<16x512xf32>
    %44 = arith.addf %42, %43 : vector<16x512xf32>
    %45 = vector.extract_strided_slice %44 {offsets = [0, 0], sizes = [16, 128], strides = [1, 1]} : vector<16x512xf32> to vector<16x128xf32>
    %46 = vector.extract_strided_slice %44 {offsets = [0, 128], sizes = [16, 128], strides = [1, 1]} : vector<16x512xf32> to vector<16x128xf32>
    %47 = vector.extract_strided_slice %44 {offsets = [0, 256], sizes = [16, 128], strides = [1, 1]} : vector<16x512xf32> to vector<16x128xf32>
    %48 = vector.extract_strided_slice %44 {offsets = [0, 384], sizes = [16, 128], strides = [1, 1]} : vector<16x512xf32> to vector<16x128xf32>
    %49 = arith.truncf %45 : vector<16x128xf32> to vector<16x128xbf16>
    %50 = arith.truncf %46 : vector<16x128xf32> to vector<16x128xbf16>
    %cst_21 = arith.constant dense<0.000000e+00> : vector<16x16xf32>
    %51 = tpu.matmul %49, %50, %cst_21 {dimension_numbers = #tpu.dot_dimension_numbers<[1], [1], [0], [0], [0, 0, 1, 0], [], []>} : vector<16x128xbf16>, vector<16x128xbf16>, vector<16x16xf32> -> vector<16x16xf32>
    %cst_22 = arith.constant 5.000000e-01 : f32
    %52 = vector.broadcast %cst_22 : f32 to vector<16x16xf32>
    %53 = arith.mulf %51, %52 : vector<16x16xf32>
    %cst_23 = arith.constant 0.000000e+00 : f32
    %54 = vector.broadcast %cst_23 : f32 to vector<16x16xf32>
    %55 = arith.cmpf ogt, %0, %54 : vector<16x16xf32>
    %cst_24 = arith.constant -1.000000e+30 : f32
    %56 = vector.broadcast %cst_24 : f32 to vector<16x16xf32>
    %57 = arith.select %55, %53, %56 : vector<16x16xi1>, vector<16x16xf32>
    %cst_25 = arith.constant dense<0xFF800000> : vector<16xf32>
    %58 = vector.multi_reduction <maximumf>, %57, %cst_25 [1] : vector<16x16xf32> to vector<16xf32>
    %59 = vector.shape_cast %58 : vector<16xf32> to vector<16x1xf32>
    %60 = vector.broadcast %59 : vector<16x1xf32> to vector<16x16xf32>
    %61 = arith.subf %57, %60 : vector<16x16xf32>
    %62 = math.exp %61 : vector<16x16xf32>
    %63 = arith.mulf %62, %0 : vector<16x16xf32>
    %cst_26 = arith.constant dense<0.000000e+00> : vector<16xf32>
    %64 = vector.multi_reduction <add>, %63, %cst_26 [1] : vector<16x16xf32> to vector<16xf32>
    %65 = vector.shape_cast %64 : vector<16xf32> to vector<16x1xf32>
    %cst_27 = arith.constant 1.000000e-30 : f32
    %66 = vector.broadcast %cst_27 : f32 to vector<16x1xf32>
    %67 = arith.maximumf %65, %66 : vector<16x1xf32>
    %68 = vector.broadcast %67 : vector<16x1xf32> to vector<16x16xf32>
    %69 = arith.divf %63, %68 : vector<16x16xf32>
    %70 = arith.truncf %69 : vector<16x16xf32> to vector<16x16xbf16>
    %71 = arith.truncf %47 : vector<16x128xf32> to vector<16x128xbf16>
    %cst_28 = arith.constant dense<0.000000e+00> : vector<16x128xf32>
    %72 = tpu.matmul %70, %71, %cst_28 {dimension_numbers = #tpu.dot_dimension_numbers<[1], [0], [0], [1], [0, 0, 1, 1], [], []>} : vector<16x16xbf16>, vector<16x128xbf16>, vector<16x128xf32> -> vector<16x128xf32>
    %73 = arith.addf %72, %48 : vector<16x128xf32>
    %c0_29 = arith.constant 0 : index
    %c0_30 = arith.constant 0 : index
    %74 = vector.load %arg6[%c0_29, %c0_30] : memref<16x128xf32, #tpu.memory_space<vmem>>, vector<16x128xf32>
    tpu.vector_store %arg6[%c0_29, %c0_30], %73 {strides = array<i32>} : memref<16x128xf32, #tpu.memory_space<vmem>>, vector<16x128xf32>,
    return
  }
}

</mosaic_0001>

<llo_original>
// kernel: tpu_custom_call.1
$region0: #{tpu_custom_call.1}
  #allocation0 [shape = 'u32[]', space=smem, size = 0x4, offset = 0x4, fixed_abs, tag = 'smem constant byte address 0x4 - core index']
  #allocation1 [shape = 'u32[144,128]{1,0:T(1,128)}', space=vmem, size = 0x12000, scoped, tag = 'internal scratch']
  %s0 = inlined_call_operand.hbm [shape: f32[16,16], index: 0, kind: input, shape index: {}]
  %s1 = inlined_call_operand.hbm [shape: f32[16,128], index: 1, kind: input, shape index: {}]
  %s2 = inlined_call_operand.hbm [shape: bf16[128,512], index: 2, kind: input, shape index: {}]
  %s3 = inlined_call_operand.vmem [shape: f32[1,512], index: 3, kind: input, shape index: {}]
  %s4 = inlined_call_operand.hbm [shape: bf16[128,512], index: 4, kind: input, shape index: {}]
  %s5 = inlined_call_operand.vmem [shape: f32[1,512], index: 5, kind: input, shape index: {}]
  %s6 = inlined_call_operand.hbm [shape: f32[16,128], index: 6, kind: output, shape index: {}]
  %s7 = sld [smem:[#allocation0]]
  $region50: #{tpu_custom_call.1} parent=0
    _
  %s9 = ssub.s32 1, %s7
  %s10 = scalar_select 0, %s9, %s7
  $region1: #{tpu_custom_call.1} parent=0
    #allocation2 [shape = 'u8[8192]{0}', space=vmem, size = 0x2000, scoped, tag = 'input window, operand 0, single buffered']
    #allocation3 [shape = 's32[1]{0}', space=sflag, size = 0x4, scoped, tag = 'scoped memory for tpu_custom_call.1']
    #allocation4 [shape = 's32[1]{0}', space=sflag, size = 0x4, scoped, tag = 'scoped memory for tpu_custom_call.1']
    #allocation5 [shape = 'u8[8192]{0}', space=vmem, size = 0x2000, scoped, tag = 'input window, operand 1, single buffered']
    #allocation6 [shape = 's32[1]{0}', space=sflag, size = 0x4, scoped, tag = 'scoped memory for tpu_custom_call.1']
    #allocation7 [shape = 'u8[131072]{0}', space=vmem, size = 0x20000, scoped, tag = 'input window, operand 2, single buffered']
    #allocation8 [shape = 'u8[131072]{0}', space=vmem, size = 0x20000, scoped, tag = 'input window, operand 4, single buffered']
    #allocation9 [shape = 's32[1]{0}', space=sflag, size = 0x4, scoped, tag = 'scoped memory for tpu_custom_call.1']
    #allocation10 [shape = 'u8[8192]{0}', space=vmem, size = 0x2000, scoped, tag = 'output window, operand 0, single buffered']
    %11 = vsyncpa [#allocation3], 0
    %12 = vsyncpa [#allocation6], 0
    %13 = vsyncpa [#allocation9], 0
    %14 = vsyncpa [#allocation4], 0
    // Predicated region
    $region2: #{tpu_custom_call.1} parent=1 // pred_check
      _
    $region3: #{tpu_custom_call.1} parent=1 // pred_check_branch
      %16 = sbr.rel (0) target = $region5
    $region4: #{tpu_custom_call.1} parent=1 // pred_region
      %s18 = ssub.s32 256, 256
      %19 = vsyncadd [#allocation3], %s18
      %s20 = sshll.u32 [#allocation2], 4
      %s21 = int_to_ptr.vmem [resolvable:$true] %s20
      %26 = dma.hbm_to_vmem [thread:$0]  %s0, 256, %s21, [#allocation3], 128, 128, 8
    $region5: #{tpu_custom_call.1} parent=1 // pred_fallthru
      _
    // Predicated region
    $region6: #{tpu_custom_call.1} parent=1 // pred_check
      _
    $region7: #{tpu_custom_call.1} parent=1 // pred_check_branch
      %28 = sbr.rel (0) target = $region9
    $region8: #{tpu_custom_call.1} parent=1 // pred_region
      %s30 = ssub.s32 256, 256
      %31 = vsyncadd [#allocation6], %s30
      %s32 = sshll.u32 [#allocation5], 4
      %s33 = int_to_ptr.vmem [resolvable:$true] %s32
      %38 = dma.hbm_to_vmem [thread:$0]  %s1, 256, %s33, [#allocation6], 128, 128, 8
    $region9: #{tpu_custom_call.1} parent=1 // pred_fallthru
      _
    // Predicated region
    $region10: #{tpu_custom_call.1} parent=1 // pred_check
      _
    $region11: #{tpu_custom_call.1} parent=1 // pred_check_branch
      %40 = sbr.rel (0) target = $region13
    $region12: #{tpu_custom_call.1} parent=1 // pred_region
      %s42 = ssub.s32 4096, 4096
      %43 = vsyncadd [#allocation6], %s42
      %s44 = sshll.u32 [#allocation7], 4
      %s45 = int_to_ptr.vmem [resolvable:$true] %s44
      %50 = dma.hbm_to_vmem [thread:$0]  %s2, 4096, %s45, [#allocation6], 256, 256, 16
    $region13: #{tpu_custom_call.1} parent=1 // pred_fallthru
      _
    // Predicated region
    $region14: #{tpu_custom_call.1} parent=1 // pred_check
      _
    $region15: #{tpu_custom_call.1} parent=1 // pred_check_branch
      %52 = sbr.rel (0) target = $region17
    $region16: #{tpu_custom_call.1} parent=1 // pred_region
      _
    $region17: #{tpu_custom_call.1} parent=1 // pred_fallthru
      _
    // Predicated region
    $region18: #{tpu_custom_call.1} parent=1 // pred_check
      _
    $region19: #{tpu_custom_call.1} parent=1 // pred_check_branch
      %54 = sbr.rel (0) target = $region21
    $region20: #{tpu_custom_call.1} parent=1 // pred_region
      %s56 = ssub.s32 4096, 4096
      %57 = vsyncadd [#allocation9], %s56
      %s58 = sshll.u32 [#allocation8], 4
      %s59 = int_to_ptr.vmem [resolvable:$true] %s58
      %64 = dma.hbm_to_vmem [thread:$0]  %s4, 4096, %s59, [#allocation9], 256, 256, 16
    $region21: #{tpu_custom_call.1} parent=1 // pred_fallthru
      _
    // Predicated region
    $region22: #{tpu_custom_call.1} parent=1 // pred_check
      _
    $region23: #{tpu_custom_call.1} parent=1 // pred_check_branch
      %66 = sbr.rel (0) target = $region25
    $region24: #{tpu_custom_call.1} parent=1 // pred_region
      _
    $region25: #{tpu_custom_call.1} parent=1 // pred_fallthru
      _
    // Predicated region
    $region26: #{tpu_custom_call.1} parent=1 // pred_check
      _
    $region27: #{tpu_custom_call.1} parent=1 // pred_check_branch
      %68 = sbr.rel (0) target = $region29
    $region28: #{tpu_custom_call.1} parent=1 // pred_region
      %69 = dma.done [#allocation3], 256
    $region29: #{tpu_custom_call.1} parent=1 // pred_fallthru
      _
    // Predicated region
    $region30: #{tpu_custom_call.1} parent=1 // pred_check
      _
    $region31: #{tpu_custom_call.1} parent=1 // pred_check_branch
      %71 = sbr.rel (0) target = $region33
    $region32: #{tpu_custom_call.1} parent=1 // pred_region
      %72 = dma.done [#allocation6], 256
    $region33: #{tpu_custom_call.1} parent=1 // pred_fallthru
      _
    // Predicated region
    $region34: #{tpu_custom_call.1} parent=1 // pred_check
      _
    $region35: #{tpu_custom_call.1} parent=1 // pred_check_branch
      %74 = sbr.rel (0) target = $region37
    $region36: #{tpu_custom_call.1} parent=1 // pred_region
      %75 = dma.done [#allocation6], 4096
    $region37: #{tpu_custom_call.1} parent=1 // pred_fallthru
      _
    // Predicated region
    $region38: #{tpu_custom_call.1} parent=1 // pred_check
      _
    $region39: #{tpu_custom_call.1} parent=1 // pred_check_branch
      %77 = sbr.rel (0) target = $region41
    $region40: #{tpu_custom_call.1} parent=1 // pred_region
      %78 = dma.done [#allocation9], 4096
    $region41: #{tpu_custom_call.1} parent=1 // pred_fallthru
      _
    %v80 = vld [vmem:[#allocation2] sm:$0xff]
    %v81 = vld [vmem:[#allocation2 + $0x8] sm:$0xff]
    %v82 = vld [vmem:[#allocation5] sm:$0xff]
    %v83 = vld [vmem:[#allocation5 + $0x8] sm:$0xff]
    %v84 = vld [vmem:[#allocation7] sm:$0xff]
    %v85 = vld [vmem:[#allocation7 + $0x8] sm:$0xff]
    %v86 = vld [vmem:[#allocation7 + $0x10] sm:$0xff]
    %v87 = vld [vmem:[#allocation7 + $0x18] sm:$0xff]
    %v88 = vld [vmem:[#allocation7 + $0x20] sm:$0xff]
    %v89 = vld [vmem:[#allocation7 + $0x28] sm:$0xff]
    %v90 = vld [vmem:[#allocation7 + $0x30] sm:$0xff]
    %v91 = vld [vmem:[#allocation7 + $0x38] sm:$0xff]
    %v92 = vld [vmem:[#allocation7 + $0x40] sm:$0xff]
    %v93 = vld [vmem:[#allocation7 + $0x48] sm:$0xff]
    %v94 = vld [vmem:[#allocation7 + $0x50] sm:$0xff]
    %v95 = vld [vmem:[#allocation7 + $0x58] sm:$0xff]
    %v96 = vld [vmem:[#allocation7 + $0x60] sm:$0xff]
    %v97 = vld [vmem:[#allocation7 + $0x68] sm:$0xff]
    %v98 = vld [vmem:[#allocation7 + $0x70] sm:$0xff]
    %v99 = vld [vmem:[#allocation7 + $0x78] sm:$0xff]
    %v100 = vld [vmem:[#allocation7 + $0x80] sm:$0xff]
    %v101 = vld [vmem:[#allocation7 + $0x88] sm:$0xff]
    %v102 = vld [vmem:[#allocation7 + $0x90] sm:$0xff]
    %v103 = vld [vmem:[#allocation7 + $0x98] sm:$0xff]
    %v104 = vld [vmem:[#allocation7 + $0xa0] sm:$0xff]
    %v105 = vld [vmem:[#allocation7 + $0xa8] sm:$0xff]
    %v106 = vld [vmem:[#allocation7 + $0xb0] sm:$0xff]
    %v107 = vld [vmem:[#allocation7 + $0xb8] sm:$0xff]
    %v108 = vld [vmem:[#allocation7 + $0xc0] sm:$0xff]
    %v109 = vld [vmem:[#allocation7 + $0xc8] sm:$0xff]
    %v110 = vld [vmem:[#allocation7 + $0xd0] sm:$0xff]
    %v111 = vld [vmem:[#allocation7 + $0xd8] sm:$0xff]
    %v112 = vld [vmem:[#allocation7 + $0xe0] sm:$0xff]
    %v113 = vld [vmem:[#allocation7 + $0xe8] sm:$0xff]
    %v114 = vld [vmem:[#allocation7 + $0xf0] sm:$0xff]
    %v115 = vld [vmem:[#allocation7 + $0xf8] sm:$0xff]
    %v116 = vld [vmem:[%s3] sm:$0xf]
    %v117 = vpack.c.bf16 %v83, %v82
    %v119 = vlaneseq
    %v120 = vshrl.u32 %v119, 7
    %v121 = vsub.s32 0, %v120
    %v122 = vrot.slane %v116, %v121
    %v123 = vlaneseq
    %v124 = vshrl.u32 %v123, 7
    %v125 = vsub.s32 1, %v124
    %v126 = vrot.slane %v116, %v125
    %v127 = vlaneseq
    %v128 = vshrl.u32 %v127, 7
    %v129 = vsub.s32 2, %v128
    %v130 = vrot.slane %v116, %v129
    %v131 = vlaneseq
    %v132 = vshrl.u32 %v131, 7
    %v133 = vsub.s32 3, %v132
    %v134 = vrot.slane %v116, %v133
    %v171 = vunpack.c.l.b16 %v84
    %v172 = vunpack.c.h.b16 %v84
    %v173 = vunpack.c.l.b16 %v85
    %v174 = vunpack.c.h.b16 %v85
    %v175 = vunpack.c.l.b16 %v86
    %v176 = vunpack.c.h.b16 %v86
    %v177 = vunpack.c.l.b16 %v87
    %v178 = vunpack.c.h.b16 %v87
    %v179 = vunpack.c.l.b16 %v88
    %v180 = vunpack.c.h.b16 %v88
    %v181 = vunpack.c.l.b16 %v89
    %v182 = vunpack.c.h.b16 %v89
    %v183 = vunpack.c.l.b16 %v90
    %v184 = vunpack.c.h.b16 %v90
    %v185 = vunpack.c.l.b16 %v91
    %v186 = vunpack.c.h.b16 %v91
    %v187 = vunpack.c.l.b16 %v92
    %v188 = vunpack.c.h.b16 %v92
    %v189 = vunpack.c.l.b16 %v93
    %v190 = vunpack.c.h.b16 %v93
    %v191 = vunpack.c.l.b16 %v94
    %v192 = vunpack.c.h.b16 %v94
    %v193 = vunpack.c.l.b16 %v95
    %v194 = vunpack.c.h.b16 %v95
    %v195 = vunpack.c.l.b16 %v96
    %v196 = vunpack.c.h.b16 %v96
    %v197 = vunpack.c.l.b16 %v97
    %v198 = vunpack.c.h.b16 %v97
    %v199 = vunpack.c.l.b16 %v98
    %v200 = vunpack.c.h.b16 %v98
    %v201 = vunpack.c.l.b16 %v99
    %v202 = vunpack.c.h.b16 %v99
    %v203 = vunpack.c.l.b16 %v100
    %v204 = vunpack.c.h.b16 %v100
    %v205 = vunpack.c.l.b16 %v101
    %v206 = vunpack.c.h.b16 %v101
    %v207 = vunpack.c.l.b16 %v102
    %v208 = vunpack.c.h.b16 %v102
    %v209 = vunpack.c.l.b16 %v103
    %v210 = vunpack.c.h.b16 %v103
    %v211 = vunpack.c.l.b16 %v104
    %v212 = vunpack.c.h.b16 %v104
    %v213 = vunpack.c.l.b16 %v105
    %v214 = vunpack.c.h.b16 %v105
    %v215 = vunpack.c.l.b16 %v106
    %v216 = vunpack.c.h.b16 %v106
    %v217 = vunpack.c.l.b16 %v107
    %v218 = vunpack.c.h.b16 %v107
    %v219 = vunpack.c.l.b16 %v108
    %v220 = vunpack.c.h.b16 %v108
    %v221 = vunpack.c.l.b16 %v109
    %v222 = vunpack.c.h.b16 %v109
    %v223 = vunpack.c.l.b16 %v110
    %v224 = vunpack.c.h.b16 %v110
    %v225 = vunpack.c.l.b16 %v111
    %v226 = vunpack.c.h.b16 %v111
    %v227 = vunpack.c.l.b16 %v112
    %v228 = vunpack.c.h.b16 %v112
    %v229 = vunpack.c.l.b16 %v113
    %v230 = vunpack.c.h.b16 %v113
    %v231 = vunpack.c.l.b16 %v114
    %v232 = vunpack.c.h.b16 %v114
    %v233 = vunpack.c.l.b16 %v115
    %v234 = vunpack.c.h.b16 %v115
    %v235 = vpack.c.b16 %v175, %v171
    %v236 = vpack.c.b16 %v176, %v172
    %v237 = vpack.c.b16 %v177, %v173
    %v238 = vpack.c.b16 %v178, %v174
    %v239 = vpack.c.b16 %v183, %v179
    %v240 = vpack.c.b16 %v184, %v180
    %v241 = vpack.c.b16 %v185, %v181
    %v242 = vpack.c.b16 %v186, %v182
    %v243 = vpack.c.b16 %v191, %v187
    %v244 = vpack.c.b16 %v192, %v188
    %v245 = vpack.c.b16 %v193, %v189
    %v246 = vpack.c.b16 %v194, %v190
    %v247 = vpack.c.b16 %v199, %v195
    %v248 = vpack.c.b16 %v200, %v196
    %v249 = vpack.c.b16 %v201, %v197
    %v250 = vpack.c.b16 %v202, %v198
    %v251 = vpack.c.b16 %v207, %v203
    %v252 = vpack.c.b16 %v208, %v204
    %v253 = vpack.c.b16 %v209, %v205
    %v254 = vpack.c.b16 %v210, %v206
    %v255 = vpack.c.b16 %v215, %v211
    %v256 = vpack.c.b16 %v216, %v212
    %v257 = vpack.c.b16 %v217, %v213
    %v258 = vpack.c.b16 %v218, %v214
    %v259 = vpack.c.b16 %v223, %v219
    %v260 = vpack.c.b16 %v224, %v220
    %v261 = vpack.c.b16 %v225, %v221
    %v262 = vpack.c.b16 %v226, %v222
    %v263 = vpack.c.b16 %v231, %v227
    %v264 = vpack.c.b16 %v232, %v228
    %v265 = vpack.c.b16 %v233, %v229
    %v266 = vpack.c.b16 %v234, %v230
    %299 = vmatprep.subr.bf16.mxu0 %v264
    %300 = vmatpush1.bf16.msra.mxu0 %v263
    %301 = vmatprep.subr.bf16.mxu0 %v260
    %302 = vmatpush1.bf16.msra.mxu0 %v259
    %303 = vmatprep.subr.bf16.mxu0 %v256
    %304 = vmatpush1.bf16.msra.mxu0 %v255
    %305 = vmatprep.subr.bf16.mxu0 %v252
    %306 = vmatpush1.bf16.msra.mxu0 %v251
    %307 = vmatprep.subr.bf16.mxu0 %v248
    %308 = vmatpush1.bf16.msra.mxu0 %v247
    %309 = vmatprep.subr.bf16.mxu0 %v244
    %310 = vmatpush1.bf16.msra.mxu0 %v243
    %311 = vmatprep.subr.bf16.mxu0 %v240
    %312 = vmatpush1.bf16.msra.mxu0 %v239
    %313 = vmatprep.subr.bf16.mxu0 %v236
    %314 = vmatpush1.bf16.msra.mxu0 %v235
    %315 = vmatprep.subr.bf16.mxu0 0
    %316 = vmatpush2.bf16.msra.mxu0 0
    %317 = vmatprep.subr.bf16.mxu0 0
    %318 = vmatpush2.bf16.msra.mxu0 0
    %319 = vmatprep.subr.bf16.mxu0 0
    %320 = vmatpush2.bf16.msra.mxu0 0
    %321 = vmatprep.subr.bf16.mxu0 0
    %322 = vmatpush2.bf16.msra.mxu0 0
    %323 = vmatprep.subr.bf16.mxu0 0
    %324 = vmatpush2.bf16.msra.mxu0 0
    %325 = vmatprep.subr.bf16.mxu0 0
    %326 = vmatpush2.bf16.msra.mxu0 0
    %327 = vmatprep.subr.bf16.mxu0 0
    %328 = vmatpush2.bf16.msra.mxu0 0
    %329 = vmatprep.subr.bf16.mxu0 0
    %330 = vmatpush2.bf16.msra.mxu0 0
    %331 = vmatprep.mubr.bf16.mxu0 0
    %332 = vmatmul.mubr.bf16.gmra.mxu0 %v117
    %v333 = vpop.f32.mrf.mxu0
    %v334 = vadd.f32 %v122, %v333
    %v335 = vpop.f32.mrf.mxu0
    %v336 = vadd.f32 %v126, %v335
    %v337 = vpop.f32.mrf.mxu0
    %v338 = vadd.f32 %v122, %v337
    %v339 = vpop.f32.mrf.mxu0
    %v340 = vadd.f32 %v126, %v339
    %341 = vdwg.mxu0
    %342 = vmatprep.subr.bf16.mxu0 %v266
    %343 = vmatpush1.bf16.msra.mxu0 %v265
    %344 = vmatprep.subr.bf16.mxu0 %v262
    %345 = vmatpush1.bf16.msra.mxu0 %v261
    %346 = vmatprep.subr.bf16.mxu0 %v258
    %347 = vmatpush1.bf16.msra.mxu0 %v257
    %348 = vmatprep.subr.bf16.mxu0 %v254
    %349 = vmatpush1.bf16.msra.mxu0 %v253
    %350 = vmatprep.subr.bf16.mxu0 %v250
    %351 = vmatpush1.bf16.msra.mxu0 %v249
    %352 = vmatprep.subr.bf16.mxu0 %v246
    %353 = vmatpush1.bf16.msra.mxu0 %v245
    %354 = vmatprep.subr.bf16.mxu0 %v242
    %355 = vmatpush1.bf16.msra.mxu0 %v241
    %356 = vmatprep.subr.bf16.mxu0 %v238
    %357 = vmatpush1.bf16.msra.mxu0 %v237
    %358 = vmatprep.subr.bf16.mxu0 0
    %359 = vmatpush2.bf16.msra.mxu0 0
    %360 = vmatprep.subr.bf16.mxu0 0
    %361 = vmatpush2.bf16.msra.mxu0 0
    %362 = vmatprep.subr.bf16.mxu0 0
    %363 = vmatpush2.bf16.msra.mxu0 0
    %364 = vmatprep.subr.bf16.mxu0 0
    %365 = vmatpush2.bf16.msra.mxu0 0
    %366 = vmatprep.subr.bf16.mxu0 0
    %367 = vmatpush2.bf16.msra.mxu0 0
    %368 = vmatprep.subr.bf16.mxu0 0
    %369 = vmatpush2.bf16.msra.mxu0 0
    %370 = vmatprep.subr.bf16.mxu0 0
    %371 = vmatpush2.bf16.msra.mxu0 0
    %372 = vmatprep.subr.bf16.mxu0 0
    %373 = vmatpush2.bf16.msra.mxu0 0
    %374 = vmatprep.mubr.bf16.mxu0 0
    %375 = vmatmul.mubr.bf16.gmra.mxu0 %v117
    %v376 = vpop.f32.mrf.mxu0
    %v377 = vadd.f32 %v130, %v376
    %v378 = vpop.f32.mrf.mxu0
    %v379 = vadd.f32 %v134, %v378
    %v380 = vpop.f32.mrf.mxu0
    %v381 = vadd.f32 %v130, %v380
    %v382 = vpop.f32.mrf.mxu0
    %v383 = vadd.f32 %v134, %v382
    %384 = vdwg.mxu0
    %v385 = vpack.c.bf16 %v338, %v334
    %v386 = vpack.c.bf16 %v340, %v336
    %387 = vmatprep.subr.bf16.mxu0 0
    %388 = vmatpush1.bf16.xpose.msra.mxu0 0
    %389 = vmatprep.subr.bf16.mxu0 0
    %390 = vmatpush1.bf16.xpose.msra.mxu0 0
    %391 = vmatprep.subr.bf16.mxu0 0
    %392 = vmatpush1.bf16.xpose.msra.mxu0 0
    %393 = vmatprep.subr.bf16.mxu0 0
    %394 = vmatpush1.bf16.xpose.msra.mxu0 0
    %395 = vmatprep.subr.bf16.mxu0 0
    %396 = vmatpush1.bf16.xpose.msra.mxu0 0
    %397 = vmatprep.subr.bf16.mxu0 0
    %398 = vmatpush1.bf16.xpose.msra.mxu0 0
    %399 = vmatprep.subr.bf16.mxu0 0
    %400 = vmatpush1.bf16.xpose.msra.mxu0 0
    %401 = vmatprep.subr.bf16.mxu0 0
    %402 = vmatpush1.bf16.xpose.msra.mxu0 %v386
    %403 = vmatprep.subr.bf16.mxu0 0
    %404 = vmatpush2.bf16.xpose.msra.mxu0 0
    %405 = vmatprep.subr.bf16.mxu0 0
    %406 = vmatpush2.bf16.xpose.msra.mxu0 0
    %407 = vmatprep.subr.bf16.mxu0 0
    %408 = vmatpush2.bf16.xpose.msra.mxu0 0
    %409 = vmatprep.subr.bf16.mxu0 0
    %410 = vmatpush2.bf16.xpose.msra.mxu0 0
    %411 = vmatprep.subr.bf16.mxu0 0
    %412 = vmatpush2.bf16.xpose.msra.mxu0 0
    %413 = vmatprep.subr.bf16.mxu0 0
    %414 = vmatpush2.bf16.xpose.msra.mxu0 0
    %415 = vmatprep.subr.bf16.mxu0 0
    %416 = vmatpush2.bf16.xpose.msra.mxu0 0
    %417 = vmatprep.subr.bf16.mxu0 0
    %418 = vmatpush2.bf16.xpose.msra.mxu0 0
    %419 = vmatprep.mubr.bf16.mxu0 0
    %420 = vmatmul.mubr.bf16.gmra.mxu0 %v385
    %v421 = vpop.f32.mrf.mxu0
    %v422 = vadd.f32 0.0, %v421
    %v423 = vpop.f32.mrf.mxu0
    %v424 = vpop.f32.mrf.mxu0
    %v425 = vadd.f32 0.0, %v424
    %v426 = vpop.f32.mrf.mxu0
    %427 = vdwg.mxu0
    %v428 = vmul.f32 %v422, 0.17677669
    %v429 = vmul.f32 %v425, 0.17677669
    %vm430 = vcmp.gt.f32.partialorder %v80, 0.0
    %vm431 = vcmp.gt.f32.partialorder %v81, 0.0
    %v432 = vsel %vm430, %v428, -1e+30
    %v433 = vsel %vm431, %v429, -1e+30
    %vm434 = vcmask 130048
    %v435 = vsel %vm434, %v432, -inf
    %436 = vmax.xlane.f32.xlu0 %v435
    %v437 = vpop.xlane.xlu0 %436
    %v438 = vsel %vm434, %v433, -inf
    %439 = vmax.xlane.f32.xlu0 %v438
    %v440 = vpop.xlane.xlu0 %439
    %v441 = vsub.f32 %v432, %v437
    %v442 = vsub.f32 %v433, %v440
    %v443 = vmul.f32 %v441, 1.442695
    %v444 = vpow.pop %v443
    %v445 = vmul.f32 %v442, 1.442695
    %v446 = vpow.pop %v445
    %v447 = vmul.f32 %v444, %v80
    %v448 = vmul.f32 %v446, %v81
    %v449 = vsel %vm434, %v447, 0.0
    %450 = vadd.xlane.f32.xlu0 %v449
    %v451 = vpop.xlane.xlu0 %450
    %v452 = vsel %vm434, %v448, 0.0
    %453 = vadd.xlane.f32.xlu0 %v452
    %v454 = vpop.xlane.xlu0 %453
    %v455 = vmax.f32 %v451, 1e-30
    %v456 = vmax.f32 %v454, 1e-30
    %v457 = vrcp.pop %v455
    %v458 = vmul.f32 %v447, %v457
    %v459 = vrcp.pop %v456
    %v460 = vmul.f32 %v448, %v459
    %v461 = vpack.c.bf16 %v460, %v458
    %v462 = vpack.c.bf16 %v381, %v377
    %v464 = vsel %vm434, %v461, 0
    %466 = vmatprep.subr.bf16.mxu0 0
    %467 = vmatpush1.bf16.msra.mxu0 0
    %468 = vmatprep.subr.bf16.mxu0 0
    %469 = vmatpush1.bf16.msra.mxu0 0
    %470 = vmatprep.subr.bf16.mxu0 0
    %471 = vmatpush1.bf16.msra.mxu0 0
    %472 = vmatprep.subr.bf16.mxu0 0
    %473 = vmatpush1.bf16.msra.mxu0 0
    %474 = vmatprep.subr.bf16.mxu0 0
    %475 = vmatpush1.bf16.msra.mxu0 0
    %476 = vmatprep.subr.bf16.mxu0 0
    %477 = vmatpush1.bf16.msra.mxu0 0
    %478 = vmatprep.subr.bf16.mxu0 0
    %479 = vmatpush1.bf16.msra.mxu0 0
    %480 = vmatprep.subr.bf16.mxu0 0
    %481 = vmatpush1.bf16.msra.mxu0 %v462
    %482 = vmatprep.subr.bf16.mxu0 0
    %483 = vmatpush2.bf16.msra.mxu0 0
    %484 = vmatprep.subr.bf16.mxu0 0
    %485 = vmatpush2.bf16.msra.mxu0 0
    %486 = vmatprep.subr.bf16.mxu0 0
    %487 = vmatpush2.bf16.msra.mxu0 0
    %488 = vmatprep.subr.bf16.mxu0 0
    %489 = vmatpush2.bf16.msra.mxu0 0
    %490 = vmatprep.subr.bf16.mxu0 0
    %491 = vmatpush2.bf16.msra.mxu0 0
    %492 = vmatprep.subr.bf16.mxu0 0
    %493 = vmatpush2.bf16.msra.mxu0 0
    %494 = vmatprep.subr.bf16.mxu0 0
    %495 = vmatpush2.bf16.msra.mxu0 0
    %496 = vmatprep.subr.bf16.mxu0 0
    %497 = vmatpush2.bf16.msra.mxu0 0
    %498 = vmatprep.mubr.bf16.mxu0 0
    %499 = vmatmul.mubr.bf16.gmra.mxu0 %v464
    %v500 = vpop.f32.mrf.mxu0
    %v501 = vadd.f32 %v379, %v500
    %v502 = vpop.f32.mrf.mxu0
    %v503 = vpop.f32.mrf.mxu0
    %v504 = vadd.f32 %v383, %v503
    %v505 = vpop.f32.mrf.mxu0
    %506 = vdwg.mxu0
    %v507 = vmax.f32 %v501, 0.0
    %v508 = vmax.f32 %v504, 0.0
    %v509 = vld [vmem:[#allocation8] sm:$0xff]
    %v510 = vld [vmem:[#allocation8 + $0x8] sm:$0xff]
    %v511 = vld [vmem:[#allocation8 + $0x10] sm:$0xff]
    %v512 = vld [vmem:[#allocation8 + $0x18] sm:$0xff]
    %v513 = vld [vmem:[#allocation8 + $0x20] sm:$0xff]
    %v514 = vld [vmem:[#allocation8 + $0x28] sm:$0xff]
    %v515 = vld [vmem:[#allocation8 + $0x30] sm:$0xff]
    %v516 = vld [vmem:[#allocation8 + $0x38] sm:$0xff]
    %v517 = vld [vmem:[#allocation8 + $0x40] sm:$0xff]
    %v518 = vld [vmem:[#allocation8 + $0x48] sm:$0xff]
    %v519 = vld [vmem:[#allocation8 + $0x50] sm:$0xff]
    %v520 = vld [vmem:[#allocation8 + $0x58] sm:$0xff]
    %v521 = vld [vmem:[#allocation8 + $0x60] sm:$0xff]
    %v522 = vld [vmem:[#allocation8 + $0x68] sm:$0xff]
    %v523 = vld [vmem:[#allocation8 + $0x70] sm:$0xff]
    %v524 = vld [vmem:[#allocation8 + $0x78] sm:$0xff]
    %v525 = vld [vmem:[#allocation8 + $0x80] sm:$0xff]
    %v526 = vld [vmem:[#allocation8 + $0x88] sm:$0xff]
    %v527 = vld [vmem:[#allocation8 + $0x90] sm:$0xff]
    %v528 = vld [vmem:[#allocation8 + $0x98] sm:$0xff]
    %v529 = vld [vmem:[#allocation8 + $0xa0] sm:$0xff]
    %v530 = vld [vmem:[#allocation8 + $0xa8] sm:$0xff]
    %v531 = vld [vmem:[#allocation8 + $0xb0] sm:$0xff]
    %v532 = vld [vmem:[#allocation8 + $0xb8] sm:$0xff]
    %v533 = vld [vmem:[#allocation8 + $0xc0] sm:$0xff]
    %v534 = vld [vmem:[#allocation8 + $0xc8] sm:$0xff]
    %v535 = vld [vmem:[#allocation8 + $0xd0] sm:$0xff]
    %v536 = vld [vmem:[#allocation8 + $0xd8] sm:$0xff]
    %v537 = vld [vmem:[#allocation8 + $0xe0] sm:$0xff]
    %v538 = vld [vmem:[#allocation8 + $0xe8] sm:$0xff]
    %v539 = vld [vmem:[#allocation8 + $0xf0] sm:$0xff]
    %v540 = vld [vmem:[#allocation8 + $0xf8] sm:$0xff]
    %v541 = vld [vmem:[%s5] sm:$0xf]
    %v542 = vpack.c.bf16 %v508, %v507
    %v544 = vlaneseq
    %v545 = vshrl.u32 %v544, 7
    %v546 = vsub.s32 0, %v545
    %v547 = vrot.slane %v541, %v546
    %v548 = vlaneseq
    %v549 = vshrl.u32 %v548, 7
    %v550 = vsub.s32 1, %v549
    %v551 = vrot.slane %v541, %v550
    %v552 = vlaneseq
    %v553 = vshrl.u32 %v552, 7
    %v554 = vsub.s32 2, %v553
    %v555 = vrot.slane %v541, %v554
    %v556 = vlaneseq
    %v557 = vshrl.u32 %v556, 7
    %v558 = vsub.s32 3, %v557
    %v559 = vrot.slane %v541, %v558
    %v596 = vunpack.c.l.b16 %v509
    %v597 = vunpack.c.h.b16 %v509
    %v598 = vunpack.c.l.b16 %v510
    %v599 = vunpack.c.h.b16 %v510
    %v600 = vunpack.c.l.b16 %v511
    %v601 = vunpack.c.h.b16 %v511
    %v602 = vunpack.c.l.b16 %v512
    %v603 = vunpack.c.h.b16 %v512
    %v604 = vunpack.c.l.b16 %v513
    %v605 = vunpack.c.h.b16 %v513
    %v606 = vunpack.c.l.b16 %v514
    %v607 = vunpack.c.h.b16 %v514
    %v608 = vunpack.c.l.b16 %v515
    %v609 = vunpack.c.h.b16 %v515
    %v610 = vunpack.c.l.b16 %v516
    %v611 = vunpack.c.h.b16 %v516
    %v612 = vunpack.c.l.b16 %v517
    %v613 = vunpack.c.h.b16 %v517
    %v614 = vunpack.c.l.b16 %v518
    %v615 = vunpack.c.h.b16 %v518
    %v616 = vunpack.c.l.b16 %v519
    %v617 = vunpack.c.h.b16 %v519
    %v618 = vunpack.c.l.b16 %v520
    %v619 = vunpack.c.h.b16 %v520
    %v620 = vunpack.c.l.b16 %v521
    %v621 = vunpack.c.h.b16 %v521
    %v622 = vunpack.c.l.b16 %v522
    %v623 = vunpack.c.h.b16 %v522
    %v624 = vunpack.c.l.b16 %v523
    %v625 = vunpack.c.h.b16 %v523
    %v626 = vunpack.c.l.b16 %v524
    %v627 = vunpack.c.h.b16 %v524
    %v628 = vunpack.c.l.b16 %v525
    %v629 = vunpack.c.h.b16 %v525
    %v630 = vunpack.c.l.b16 %v526
    %v631 = vunpack.c.h.b16 %v526
    %v632 = vunpack.c.l.b16 %v527
    %v633 = vunpack.c.h.b16 %v527
    %v634 = vunpack.c.l.b16 %v528
    %v635 = vunpack.c.h.b16 %v528
    %v636 = vunpack.c.l.b16 %v529
    %v637 = vunpack.c.h.b16 %v529
    %v638 = vunpack.c.l.b16 %v530
    %v639 = vunpack.c.h.b16 %v530
    %v640 = vunpack.c.l.b16 %v531
    %v641 = vunpack.c.h.b16 %v531
    %v642 = vunpack.c.l.b16 %v532
    %v643 = vunpack.c.h.b16 %v532
    %v644 = vunpack.c.l.b16 %v533
    %v645 = vunpack.c.h.b16 %v533
    %v646 = vunpack.c.l.b16 %v534
    %v647 = vunpack.c.h.b16 %v534
    %v648 = vunpack.c.l.b16 %v535
    %v649 = vunpack.c.h.b16 %v535
    %v650 = vunpack.c.l.b16 %v536
    %v651 = vunpack.c.h.b16 %v536
    %v652 = vunpack.c.l.b16 %v537
    %v653 = vunpack.c.h.b16 %v537
    %v654 = vunpack.c.l.b16 %v538
    %v655 = vunpack.c.h.b16 %v538
    %v656 = vunpack.c.l.b16 %v539
    %v657 = vunpack.c.h.b16 %v539
    %v658 = vunpack.c.l.b16 %v540
    %v659 = vunpack.c.h.b16 %v540
    %v660 = vpack.c.b16 %v600, %v596
    %v661 = vpack.c.b16 %v601, %v597
    %v662 = vpack.c.b16 %v602, %v598
    %v663 = vpack.c.b16 %v603, %v599
    %v664 = vpack.c.b16 %v608, %v604
    %v665 = vpack.c.b16 %v609, %v605
    %v666 = vpack.c.b16 %v610, %v606
    %v667 = vpack.c.b16 %v611, %v607
    %v668 = vpack.c.b16 %v616, %v612
    %v669 = vpack.c.b16 %v617, %v613
    %v670 = vpack.c.b16 %v618, %v614
    %v671 = vpack.c.b16 %v619, %v615
    %v672 = vpack.c.b16 %v624, %v620
    %v673 = vpack.c.b16 %v625, %v621
    %v674 = vpack.c.b16 %v626, %v622
    %v675 = vpack.c.b16 %v627, %v623
    %v676 = vpack.c.b16 %v632, %v628
    %v677 = vpack.c.b16 %v633, %v629
    %v678 = vpack.c.b16 %v634, %v630
    %v679 = vpack.c.b16 %v635, %v631
    %v680 = vpack.c.b16 %v640, %v636
    %v681 = vpack.c.b16 %v641, %v637
    %v682 = vpack.c.b16 %v642, %v638
    %v683 = vpack.c.b16 %v643, %v639
    %v684 = vpack.c.b16 %v648, %v644
    %v685 = vpack.c.b16 %v649, %v645
    %v686 = vpack.c.b16 %v650, %v646
    %v687 = vpack.c.b16 %v651, %v647
    %v688 = vpack.c.b16 %v656, %v652
    %v689 = vpack.c.b16 %v657, %v653
    %v690 = vpack.c.b16 %v658, %v654
    %v691 = vpack.c.b16 %v659, %v655
    %724 = vmatprep.subr.bf16.mxu0 %v689
    %725 = vmatpush1.bf16.msra.mxu0 %v688
    %726 = vmatprep.subr.bf16.mxu0 %v685
    %727 = vmatpush1.bf16.msra.mxu0 %v684
    %728 = vmatprep.subr.bf16.mxu0 %v681
    %729 = vmatpush1.bf16.msra.mxu0 %v680
    %730 = vmatprep.subr.bf16.mxu0 %v677
    %731 = vmatpush1.bf16.msra.mxu0 %v676
    %732 = vmatprep.subr.bf16.mxu0 %v673
    %733 = vmatpush1.bf16.msra.mxu0 %v672
    %734 = vmatprep.subr.bf16.mxu0 %v669
    %735 = vmatpush1.bf16.msra.mxu0 %v668
    %736 = vmatprep.subr.bf16.mxu0 %v665
    %737 = vmatpush1.bf16.msra.mxu0 %v664
    %738 = vmatprep.subr.bf16.mxu0 %v661
    %739 = vmatpush1.bf16.msra.mxu0 %v660
    %740 = vmatprep.subr.bf16.mxu0 0
    %741 = vmatpush2.bf16.msra.mxu0 0
    %742 = vmatprep.subr.bf16.mxu0 0
    %743 = vmatpush2.bf16.msra.mxu0 0
    %744 = vmatprep.subr.bf16.mxu0 0
    %745 = vmatpush2.bf16.msra.mxu0 0
    %746 = vmatprep.subr.bf16.mxu0 0
    %747 = vmatpush2.bf16.msra.mxu0 0
    %748 = vmatprep.subr.bf16.mxu0 0
    %749 = vmatpush2.bf16.msra.mxu0 0
    %750 = vmatprep.subr.bf16.mxu0 0
    %751 = vmatpush2.bf16.msra.mxu0 0
    %752 = vmatprep.subr.bf16.mxu0 0
    %753 = vmatpush2.bf16.msra.mxu0 0
    %754 = vmatprep.subr.bf16.mxu0 0
    %755 = vmatpush2.bf16.msra.mxu0 0
    %756 = vmatprep.mubr.bf16.mxu0 0
    %757 = vmatmul.mubr.bf16.gmra.mxu0 %v542
    %v758 = vpop.f32.mrf.mxu0
    %v759 = vadd.f32 %v547, %v758
    %v760 = vpop.f32.mrf.mxu0
    %v761 = vadd.f32 %v551, %v760
    %v762 = vpop.f32.mrf.mxu0
    %v763 = vadd.f32 %v547, %v762
    %v764 = vpop.f32.mrf.mxu0
    %v765 = vadd.f32 %v551, %v764
    %766 = vdwg.mxu0
    %767 = vmatprep.subr.bf16.mxu0 %v691
    %768 = vmatpush1.bf16.msra.mxu0 %v690
    %769 = vmatprep.subr.bf16.mxu0 %v687
    %770 = vmatpush1.bf16.msra.mxu0 %v686
    %771 = vmatprep.subr.bf16.mxu0 %v683
    %772 = vmatpush1.bf16.msra.mxu0 %v682
    %773 = vmatprep.subr.bf16.mxu0 %v679
    %774 = vmatpush1.bf16.msra.mxu0 %v678
    %775 = vmatprep.subr.bf16.mxu0 %v675
    %776 = vmatpush1.bf16.msra.mxu0 %v674
    %777 = vmatprep.subr.bf16.mxu0 %v671
    %778 = vmatpush1.bf16.msra.mxu0 %v670
    %779 = vmatprep.subr.bf16.mxu0 %v667
    %780 = vmatpush1.bf16.msra.mxu0 %v666
    %781 = vmatprep.subr.bf16.mxu0 %v663
    %782 = vmatpush1.bf16.msra.mxu0 %v662
    %783 = vmatprep.subr.bf16.mxu0 0
    %784 = vmatpush2.bf16.msra.mxu0 0
    %785 = vmatprep.subr.bf16.mxu0 0
    %786 = vmatpush2.bf16.msra.mxu0 0
    %787 = vmatprep.subr.bf16.mxu0 0
    %788 = vmatpush2.bf16.msra.mxu0 0
    %789 = vmatprep.subr.bf16.mxu0 0
    %790 = vmatpush2.bf16.msra.mxu0 0
    %791 = vmatprep.subr.bf16.mxu0 0
    %792 = vmatpush2.bf16.msra.mxu0 0
    %793 = vmatprep.subr.bf16.mxu0 0
    %794 = vmatpush2.bf16.msra.mxu0 0
    %795 = vmatprep.subr.bf16.mxu0 0
    %796 = vmatpush2.bf16.msra.mxu0 0
    %797 = vmatprep.subr.bf16.mxu0 0
    %798 = vmatpush2.bf16.msra.mxu0 0
    %799 = vmatprep.mubr.bf16.mxu0 0
    %800 = vmatmul.mubr.bf16.gmra.mxu0 %v542
    %v801 = vpop.f32.mrf.mxu0
    %v802 = vadd.f32 %v555, %v801
    %v803 = vpop.f32.mrf.mxu0
    %v804 = vadd.f32 %v559, %v803
    %v805 = vpop.f32.mrf.mxu0
    %v806 = vadd.f32 %v555, %v805
    %v807 = vpop.f32.mrf.mxu0
    %v808 = vadd.f32 %v559, %v807
    %809 = vdwg.mxu0
    %v810 = vpack.c.bf16 %v763, %v759
    %v811 = vpack.c.bf16 %v765, %v761
    %812 = vmatprep.subr.bf16.mxu0 0
    %813 = vmatpush1.bf16.xpose.msra.mxu0 0
    %814 = vmatprep.subr.bf16.mxu0 0
    %815 = vmatpush1.bf16.xpose.msra.mxu0 0
    %816 = vmatprep.subr.bf16.mxu0 0
    %817 = vmatpush1.bf16.xpose.msra.mxu0 0
    %818 = vmatprep.subr.bf16.mxu0 0
    %819 = vmatpush1.bf16.xpose.msra.mxu0 0
    %820 = vmatprep.subr.bf16.mxu0 0
    %821 = vmatpush1.bf16.xpose.msra.mxu0 0
    %822 = vmatprep.subr.bf16.mxu0 0
    %823 = vmatpush1.bf16.xpose.msra.mxu0 0
    %824 = vmatprep.subr.bf16.mxu0 0
    %825 = vmatpush1.bf16.xpose.msra.mxu0 0
    %826 = vmatprep.subr.bf16.mxu0 0
    %827 = vmatpush1.bf16.xpose.msra.mxu0 %v811
    %828 = vmatprep.subr.bf16.mxu0 0
    %829 = vmatpush2.bf16.xpose.msra.mxu0 0
    %830 = vmatprep.subr.bf16.mxu0 0
    %831 = vmatpush2.bf16.xpose.msra.mxu0 0
    %832 = vmatprep.subr.bf16.mxu0 0
    %833 = vmatpush2.bf16.xpose.msra.mxu0 0
    %834 = vmatprep.subr.bf16.mxu0 0
    %835 = vmatpush2.bf16.xpose.msra.mxu0 0
    %836 = vmatprep.subr.bf16.mxu0 0
    %837 = vmatpush2.bf16.xpose.msra.mxu0 0
    %838 = vmatprep.subr.bf16.mxu0 0
    %839 = vmatpush2.bf16.xpose.msra.mxu0 0
    %840 = vmatprep.subr.bf16.mxu0 0
    %841 = vmatpush2.bf16.xpose.msra.mxu0 0
    %842 = vmatprep.subr.bf16.mxu0 0
    %843 = vmatpush2.bf16.xpose.msra.mxu0 0
    %844 = vmatprep.mubr.bf16.mxu0 0
    %845 = vmatmul.mubr.bf16.gmra.mxu0 %v810
    %v846 = vpop.f32.mrf.mxu0
    %v847 = vadd.f32 0.0, %v846
    %v848 = vpop.f32.mrf.mxu0
    %v849 = vpop.f32.mrf.mxu0
    %v850 = vadd.f32 0.0, %v849
    %v851 = vpop.f32.mrf.mxu0
    %852 = vdwg.mxu0
    %v853 = vmul.f32 %v847, 0.5
    %v854 = vmul.f32 %v850, 0.5
    %v855 = vsel %vm430, %v853, -1e+30
    %v856 = vsel %vm431, %v854, -1e+30
    %v857 = vsel %vm434, %v855, -inf
    %858 = vmax.xlane.f32.xlu0 %v857
    %v859 = vpop.xlane.xlu0 %858
    %v860 = vsel %vm434, %v856, -inf
    %861 = vmax.xlane.f32.xlu0 %v860
    %v862 = vpop.xlane.xlu0 %861
    %v863 = vsub.f32 %v855, %v859
    %v864 = vsub.f32 %v856, %v862
    %v865 = vmul.f32 %v863, 1.442695
    %v866 = vpow.pop %v865
    %v867 = vmul.f32 %v864, 1.442695
    %v868 = vpow.pop %v867
    %v869 = vmul.f32 %v866, %v80
    %v870 = vmul.f32 %v868, %v81
    %v871 = vsel %vm434, %v869, 0.0
    %872 = vadd.xlane.f32.xlu0 %v871
    %v873 = vpop.xlane.xlu0 %872
    %v874 = vsel %vm434, %v870, 0.0
    %875 = vadd.xlane.f32.xlu0 %v874
    %v876 = vpop.xlane.xlu0 %875
    %v877 = vmax.f32 %v873, 1e-30
    %v878 = vmax.f32 %v876, 1e-30
    %v879 = vrcp.pop %v877
    %v880 = vmul.f32 %v869, %v879
    %v881 = vrcp.pop %v878
    %v882 = vmul.f32 %v870, %v881
    %v883 = vpack.c.bf16 %v882, %v880
    %v884 = vpack.c.bf16 %v806, %v802
    %v886 = vsel %vm434, %v883, 0
    %888 = vmatprep.subr.bf16.mxu0 0
    %889 = vmatpush1.bf16.msra.mxu0 0
    %890 = vmatprep.subr.bf16.mxu0 0
    %891 = vmatpush1.bf16.msra.mxu0 0
    %892 = vmatprep.subr.bf16.mxu0 0
    %893 = vmatpush1.bf16.msra.mxu0 0
    %894 = vmatprep.subr.bf16.mxu0 0
    %895 = vmatpush1.bf16.msra.mxu0 0
    %896 = vmatprep.subr.bf16.mxu0 0
    %897 = vmatpush1.bf16.msra.mxu0 0
    %898 = vmatprep.subr.bf16.mxu0 0
    %899 = vmatpush1.bf16.msra.mxu0 0
    %900 = vmatprep.subr.bf16.mxu0 0
    %901 = vmatpush1.bf16.msra.mxu0 0
    %902 = vmatprep.subr.bf16.mxu0 0
    %903 = vmatpush1.bf16.msra.mxu0 %v884
    %904 = vmatprep.subr.bf16.mxu0 0
    %905 = vmatpush2.bf16.msra.mxu0 0
    %906 = vmatprep.subr.bf16.mxu0 0
    %907 = vmatpush2.bf16.msra.mxu0 0
    %908 = vmatprep.subr.bf16.mxu0 0
    %909 = vmatpush2.bf16.msra.mxu0 0
    %910 = vmatprep.subr.bf16.mxu0 0
    %911 = vmatpush2.bf16.msra.mxu0 0
    %912 = vmatprep.subr.bf16.mxu0 0
    %913 = vmatpush2.bf16.msra.mxu0 0
    %914 = vmatprep.subr.bf16.mxu0 0
    %915 = vmatpush2.bf16.msra.mxu0 0
    %916 = vmatprep.subr.bf16.mxu0 0
    %917 = vmatpush2.bf16.msra.mxu0 0
    %918 = vmatprep.subr.bf16.mxu0 0
    %919 = vmatpush2.bf16.msra.mxu0 0
    %920 = vmatprep.mubr.bf16.mxu0 0
    %921 = vmatmul.mubr.bf16.gmra.mxu0 %v886
    %v922 = vpop.f32.mrf.mxu0
    %v923 = vadd.f32 %v804, %v922
    %v924 = vpop.f32.mrf.mxu0
    %v925 = vpop.f32.mrf.mxu0
    %v926 = vadd.f32 %v808, %v925
    %v927 = vpop.f32.mrf.mxu0
    %928 = vdwg.mxu0
    %929 = vst [vmem:[#allocation10] sm:$0xff] %v923
    %930 = vst [vmem:[#allocation10 + $0x8] sm:$0xff] %v926
    // Predicated region
    $region42: #{tpu_custom_call.1} parent=1 // pred_check
      _
    $region43: #{tpu_custom_call.1} parent=1 // pred_check_branch
      %932 = sbr.rel (0) target = $region45
    $region44: #{tpu_custom_call.1} parent=1 // pred_region
      %s934 = ssub.s32 256, 256
      %935 = vsyncadd [#allocation4], %s934
      %s936 = sshll.u32 [#allocation10], 4
      %s937 = int_to_ptr.vmem [resolvable:$true] %s936
      %942 = dma.vmem_to_hbm [thread:$0]  %s937, 256, %s6, [#allocation4], 128, 128, 8
    $region45: #{tpu_custom_call.1} parent=1 // pred_fallthru
      _
    // Predicated region
    $region46: #{tpu_custom_call.1} parent=1 // pred_check
      _
    $region47: #{tpu_custom_call.1} parent=1 // pred_check_branch
      %944 = sbr.rel (0) target = $region49
    $region48: #{tpu_custom_call.1} parent=1 // pred_region
      %945 = dma.done [#allocation4], 256
    $region49: #{tpu_custom_call.1} parent=1 // pred_fallthru
      _
    %946 = vsyncpa [#allocation3], 1
    %947 = vsyncpa [#allocation6], 1
    %948 = vsyncpa [#allocation9], 1
    %949 = vsyncpa [#allocation4], 1

</llo_original>
